<compile_context>
chip_gen: v7x
topology: tpu7x:2x2x1
jax: 0.10.0
libtpu: 0.0.40
codegen_flags: <defaults>
</compile_context>

<pallas_src>
import math

import jax
import jax.numpy as jnp
from jax.experimental import pallas as pl
from jax.experimental.pallas import tpu as pltpu


def _round_up(x: int, m: int) -> int:
    return ((x + m - 1) // m) * m


def _choose_tile(batch: int, block_batch: int) -> int:
    """Rows per grid step: multiple of 8 (128 when it matters); >=2 steps for big batches."""
    full = _round_up(batch, 8)
    tb = min(_round_up(block_batch, 128), full)
    # v7x megacore: the "parallel" grid axis is the only cross-TensorCore split, so keep at
    # least 2 grid steps once the batch is large enough for the split to matter.
    if full >= 2048:
        tb = min(tb, _round_up(pl.cdiv(full, 2), 128))
    return max(8, _round_up(tb, 8))


def _make_mlp_kernel(num_hidden: int):
    """Fused transposed-layout MLP kernel.

    Kernel args: (x_ref, w0, b0, ..., w_{H-1}, b_{H-1}, w_last, b_last, out_ref)
      x_ref : f32 (tb, input_dim)                      -- streamed batch tile
      w_i   : bf16 (out_i, in_i)   (PyTorch layout)    -- MXU operand
      b_i   : f32  (out_i, 1)
      w_last: f32  (K, 1)   [or (1, input_dim) when num_hidden == 0]
      b_last: f32  (1, 1)
      out   : f32  (1, 1, tb)                          -- lane-dense logit row
    """

    def kernel(*refs):
        x_ref = refs[0]
        out_ref = refs[-1]
        p = refs[1:-1]
        assert len(p) == 2 * num_hidden + 2

        # Contract the feature axis of BOTH operands (A @ B^T, the q@k^T pattern): no explicit
        # XLU transpose needed, and the activation comes out lane-dense as (out, tb).
        dn = (((1,), (1,)), ((), ()))

        if num_hidden == 0:
            # Degenerate case: a single Linear(input_dim, 1) directly on z.
            w_last = p[0][...]                       # f32 (1, input_dim)
            b_last = p[1][...]                       # f32 (1, 1)
            logit = jax.lax.dot_general(
                w_last, x_ref[...].astype(jnp.float32), dn,
                preferred_element_type=jnp.float32) + b_last
        else:
            xb = x_ref[...].astype(jnp.bfloat16)     # on-chip cast (VPU) -> halves z HBM cost
            h = jax.lax.dot_general(
                p[0][...], xb, dn, preferred_element_type=jnp.float32) + p[1][...]
            h = jnp.maximum(h, 0.0)                  # f32 ReLU (v5e-safe elementwise path)
            for i in range(1, num_hidden):
                w = p[2 * i][...]                    # bf16 (out_i, in_i)
                b = p[2 * i + 1][...]                # f32  (out_i, 1)
                h = jnp.dot(w, h.astype(jnp.bfloat16),
                            preferred_element_type=jnp.float32) + b
                h = jnp.maximum(h, 0.0)
            # Final Linear (N=1): broadcast-mul + sublane reduce on VPU/XLU — skips the
            # wasteful M=1 MXU pass and yields a lane-dense (1, tb) logit for free.
            w_last = p[-2][...]                      # f32 (K, 1)
            b_last = p[-1][...]                      # f32 (1, 1)
            logit = jnp.sum(h * w_last, axis=0, keepdims=True) + b_last

        out_ref[...] = jax.nn.sigmoid(logit)[None]   # (1, 1, tb); exp on EUP

    return kernel


def duplicate_classifier_forward(z, params, *, block_batch=4096):
    """params: list of (W, b) in PyTorch layout; W: (out_dim, in_dim), b: (out_dim,).

    Returns sigmoid scores of shape (batch, 1).
    """
    batch, input_dim = z.shape
    num_hidden = len(params) - 1

    # Parameters are tiny: cast hidden weights to bf16 (MXU), keep biases / last layer f32.
    flat = []
    for w, b in params[:num_hidden]:
        flat.append(jnp.asarray(w, jnp.bfloat16))                     # (out, in)
        flat.append(jnp.asarray(b, jnp.float32).reshape(-1, 1))       # (out, 1)
    w_last, b_last = params[-1]
    if num_hidden == 0:
        flat.append(jnp.asarray(w_last, jnp.float32).reshape(1, -1))  # (1, input_dim)
    else:
        flat.append(jnp.asarray(w_last, jnp.float32).reshape(-1, 1))  # (K, 1)
    flat.append(jnp.asarray(b_last, jnp.float32).reshape(1, 1))       # (1, 1)

    tb = _choose_tile(batch, block_batch)
    num_tiles = pl.cdiv(batch, tb)

    # z streams per tile (ragged final block masked by Pallas); params use a constant block
    # index -> VMEM-resident for the whole grid. (pipeline_mode=pl.Buffered(1) on the param
    # specs would drop their second buffer — negligible at these sizes, omitted.)
    # TODO(synk): if the z copy-in ever shows up exposed in a profile, accept z pre-transposed
    # as (input_dim, batch) from its producer so the DMA rows are lane-dense.
    in_specs = [pl.BlockSpec((tb, input_dim), lambda i: (i, 0))]
    for arr in flat:
        in_specs.append(pl.BlockSpec(arr.shape, lambda i: (0, 0)))

    out = pl.pallas_call(
        _make_mlp_kernel(num_hidden),
        grid=(num_tiles,),
        in_specs=in_specs,
        out_specs=pl.BlockSpec((1, 1, tb), lambda i: (i, 0, 0)),
        out_shape=jax.ShapeDtypeStruct((num_tiles, 1, tb), jnp.float32),
        compiler_params=pltpu.CompilerParams(
            dimension_semantics=("parallel",),   # megacore split on v7x; measured no-op on v5e/v6e
        ),
    )(z, *flat)

    # Lane-dense slab -> (batch, 1); tail rows beyond `batch` are sigmoid(garbage) and dropped.
    return out.reshape(-1)[:batch].reshape(batch, 1)


def init_params(key, input_dim, n_layers):
    """PyTorch-layout init: Linear(in, out) has weight (out, in), bias (out,)."""
    dims = [input_dim] + list(n_layers) + [1]
    params = []
    for i in range(len(dims) - 1):
        in_d, out_d = dims[i], dims[i + 1]
        key, kw, kb = jax.random.split(key, 3)
        bound = 1.0 / math.sqrt(in_d)
        w = jax.random.uniform(kw, (out_d, in_d), jnp.float32, -bound, bound)
        b = jax.random.uniform(kb, (out_d,), jnp.float32, -bound, bound)
        params.append((w, b))
    return params


def reference_forward(z, params):
    """Plain-JAX f32 reference of the same forward pass (PyTorch weight layout)."""
    h = z
    n = len(params)
    for i, (w, b) in enumerate(params):
        h = h @ w.T + b
        if i < n - 1:
            h = jnp.maximum(h, 0.0)
    return jax.nn.sigmoid(h)


if __name__ == "__main__":
    key = jax.random.PRNGKey(0)

    input_dim = 32
    n_layers = [64, 32]   # the Optuna-searched hidden widths
    # TODO(synk): if the architecture is negotiable, pad hidden widths up to multiples of 128
    # (free: they are VMEM-resident) — but do NOT pad input_dim (it multiplies z HBM traffic).

    key, kz, kp = jax.random.split(key, 3)
    params = init_params(kp, input_dim, n_layers)

    # Small single-tile correctness check.
    z_small = jax.random.normal(kz, (8, input_dim), jnp.float32)
    out_small = jax.block_until_ready(duplicate_classifier_forward(z_small, params))
    ref_small = reference_forward(z_small, params)
    assert out_small.shape == (8, 1), out_small.shape
    assert jnp.allclose(out_small, ref_small, atol=2e-2), (out_small, ref_small)

    # Multi-tile path: batch tiling, ragged final block, VMEM-resident weights, parallel axis.
    key, kz2 = jax.random.split(key)
    z_big = jax.random.normal(kz2, (520, input_dim), jnp.float32)
    out_big = jax.block_until_ready(
        duplicate_classifier_forward(z_big, params, block_batch=256))
    ref_big = reference_forward(z_big, params)
    assert out_big.shape == (520, 1), out_big.shape
    assert jnp.allclose(out_big, ref_big, atol=2e-2)

    print("KERNEL_OK")
</pallas_src>

<mosaic_0001>
module attributes {stable_mosaic.version = 11 : i64} {
  func.func @kernel(%arg0: i32, %arg1: memref<8x32xf32, #tpu.memory_space<vmem>>, %arg2: memref<64x32xbf16, #tpu.memory_space<vmem>>, %arg3: memref<64x1xf32, #tpu.memory_space<vmem>>, %arg4: memref<32x64xbf16, #tpu.memory_space<vmem>>, %arg5: memref<32x1xf32, #tpu.memory_space<vmem>>, %arg6: memref<32x1xf32, #tpu.memory_space<vmem>>, %arg7: memref<1x1xf32, #tpu.memory_space<vmem>>, %arg8: memref<1x1x8xf32, #tpu.memory_space<vmem>>) attributes {dimension_semantics = [#tpu.dimension_semantics<parallel>], iteration_bounds = array<i64: 1>, scalar_prefetch = 0 : i64, scratch_operands = 0 : i64, tpu.core_type = #tpu.core_type<tc>, window_params = [{transform_indices = @transform_0, window_bounds = array<i64: 8, 32>}, {pipeline_mode = #tpu.pipeline_mode<synchronous>, transform_indices = @transform_1, window_bounds = array<i64: 64, 32>}, {pipeline_mode = #tpu.pipeline_mode<synchronous>, transform_indices = @transform_2, window_bounds = array<i64: 64, 1>}, {pipeline_mode = #tpu.pipeline_mode<synchronous>, transform_indices = @transform_3, window_bounds = array<i64: 32, 64>}, {pipeline_mode = #tpu.pipeline_mode<synchronous>, transform_indices = @transform_4, window_bounds = array<i64: 32, 1>}, {pipeline_mode = #tpu.pipeline_mode<synchronous>, transform_indices = @transform_5, window_bounds = array<i64: 32, 1>}, {pipeline_mode = #tpu.pipeline_mode<synchronous>, transform_indices = @transform_6, window_bounds = array<i64: 1, 1>}, {transform_indices = @transform_7, window_bounds = array<i64: 1, 1, 8>}]} {
    %c0 = arith.constant 0 : index
    %c0_0 = arith.constant 0 : index
    %0 = vector.load %arg1[%c0, %c0_0] : memref<8x32xf32, #tpu.memory_space<vmem>>, vector<8x32xf32>
    %1 = arith.truncf %0 : vector<8x32xf32> to vector<8x32xbf16>
    %c0_1 = arith.constant 0 : index
    %c0_2 = arith.constant 0 : index
    %2 = vector.load %arg2[%c0_1, %c0_2] : memref<64x32xbf16, #tpu.memory_space<vmem>>, vector<64x32xbf16>
    %cst = arith.constant dense<0.000000e+00> : vector<64x8xf32>
    %3 = tpu.matmul %2, %1, %cst {dimension_numbers = #tpu.dot_dimension_numbers<[1], [1], [0], [0], [0, 0, 1, 0], [], []>} : vector<64x32xbf16>, vector<8x32xbf16>, vector<64x8xf32> -> vector<64x8xf32>
    %c0_3 = arith.constant 0 : index
    %c0_4 = arith.constant 0 : index
    %4 = vector.load %arg3[%c0_3, %c0_4] : memref<64x1xf32, #tpu.memory_space<vmem>>, vector<64x1xf32>
    %5 = vector.broadcast %4 : vector<64x1xf32> to vector<64x8xf32>
    %6 = arith.addf %3, %5 : vector<64x8xf32>
    %cst_5 = arith.constant 0.000000e+00 : f32
    %7 = vector.broadcast %cst_5 : f32 to vector<64x8xf32>
    %8 = arith.maximumf %6, %7 : vector<64x8xf32>
    %c0_6 = arith.constant 0 : index
    %c0_7 = arith.constant 0 : index
    %9 = vector.load %arg4[%c0_6, %c0_7] : memref<32x64xbf16, #tpu.memory_space<vmem>>, vector<32x64xbf16>
    %c0_8 = arith.constant 0 : index
    %c0_9 = arith.constant 0 : index
    %10 = vector.load %arg5[%c0_8, %c0_9] : memref<32x1xf32, #tpu.memory_space<vmem>>, vector<32x1xf32>
    %11 = arith.truncf %8 : vector<64x8xf32> to vector<64x8xbf16>
    %cst_10 = arith.constant dense<0.000000e+00> : vector<32x8xf32>
    %12 = tpu.matmul %9, %11, %cst_10 {dimension_numbers = #tpu.dot_dimension_numbers<[1], [0], [0], [1], [0, 0, 1, 1], [], []>} : vector<32x64xbf16>, vector<64x8xbf16>, vector<32x8xf32> -> vector<32x8xf32>
    %13 = vector.broadcast %10 : vector<32x1xf32> to vector<32x8xf32>
    %14 = arith.addf %12, %13 : vector<32x8xf32>
    %cst_11 = arith.constant 0.000000e+00 : f32
    %15 = vector.broadcast %cst_11 : f32 to vector<32x8xf32>
    %16 = arith.maximumf %14, %15 : vector<32x8xf32>
    %c0_12 = arith.constant 0 : index
    %c0_13 = arith.constant 0 : index
    %17 = vector.load %arg6[%c0_12, %c0_13] : memref<32x1xf32, #tpu.memory_space<vmem>>, vector<32x1xf32>
    %c0_14 = arith.constant 0 : index
    %c0_15 = arith.constant 0 : index
    %18 = vector.load %arg7[%c0_14, %c0_15] : memref<1x1xf32, #tpu.memory_space<vmem>>, vector<1x1xf32>
    %19 = vector.broadcast %17 : vector<32x1xf32> to vector<32x8xf32>
    %20 = arith.mulf %16, %19 : vector<32x8xf32>
    %cst_16 = arith.constant dense<0.000000e+00> : vector<8xf32>
    %21 = vector.multi_reduction <add>, %20, %cst_16 [0] : vector<32x8xf32> to vector<8xf32>
    %22 = vector.shape_cast %21 : vector<8xf32> to vector<1x8xf32>
    %23 = vector.broadcast %18 : vector<1x1xf32> to vector<1x8xf32>
    %24 = arith.addf %22, %23 : vector<1x8xf32>
    %25 = arith.negf %24 : vector<1x8xf32>
    %26 = math.exp %25 : vector<1x8xf32>
    %cst_17 = arith.constant 1.000000e+00 : f32
    %27 = vector.broadcast %cst_17 : f32 to vector<1x8xf32>
    %28 = arith.addf %27, %26 : vector<1x8xf32>
    %29 = arith.divf %27, %28 : vector<1x8xf32>
    %30 = vector.shape_cast %29 : vector<1x8xf32> to vector<1x1x8xf32>
    %c0_18 = arith.constant 0 : index
    %c0_19 = arith.constant 0 : index
    %c0_20 = arith.constant 0 : index
    %31 = vector.load %arg8[%c0_18, %c0_19, %c0_20] : memref<1x1x8xf32, #tpu.memory_space<vmem>>, vector<1x1x8xf32>
    tpu.vector_store %arg8[%c0_18, %c0_19, %c0_20], %30 {strides = array<i32>} : memref<1x1x8xf32, #tpu.memory_space<vmem>>, vector<1x1x8xf32>,
    return
  }
  func.func @transform_0(%arg0: i32) -> (i32, i32) {
    %c0_i32 = arith.constant 0 : i32
    %c0_i32_0 = arith.constant 0 : i32
    return %arg0, %c0_i32 : i32, i32
  }
  func.func @transform_1(%arg0: i32) -> (i32, i32) {
    %c0_i32 = arith.constant 0 : i32
    %c0_i32_0 = arith.constant 0 : i32
    %c0_i32_1 = arith.constant 0 : i32
    return %c0_i32, %c0_i32_0 : i32, i32
  }
  func.func @transform_2(%arg0: i32) -> (i32, i32) {
    %c0_i32 = arith.constant 0 : i32
    %c0_i32_0 = arith.constant 0 : i32
    %c0_i32_1 = arith.constant 0 : i32
    return %c0_i32, %c0_i32_0 : i32, i32
  }
  func.func @transform_3(%arg0: i32) -> (i32, i32) {
    %c0_i32 = arith.constant 0 : i32
    %c0_i32_0 = arith.constant 0 : i32
    %c0_i32_1 = arith.constant 0 : i32
    return %c0_i32, %c0_i32_0 : i32, i32
  }
  func.func @transform_4(%arg0: i32) -> (i32, i32) {
    %c0_i32 = arith.constant 0 : i32
    %c0_i32_0 = arith.constant 0 : i32
    %c0_i32_1 = arith.constant 0 : i32
    return %c0_i32, %c0_i32_0 : i32, i32
  }
  func.func @transform_5(%arg0: i32) -> (i32, i32) {
    %c0_i32 = arith.constant 0 : i32
    %c0_i32_0 = arith.constant 0 : i32
    %c0_i32_1 = arith.constant 0 : i32
    return %c0_i32, %c0_i32_0 : i32, i32
  }
  func.func @transform_6(%arg0: i32) -> (i32, i32) {
    %c0_i32 = arith.constant 0 : i32
    %c0_i32_0 = arith.constant 0 : i32
    %c0_i32_1 = arith.constant 0 : i32
    return %c0_i32, %c0_i32_0 : i32, i32
  }
  func.func @transform_7(%arg0: i32) -> (i32, i32, i32) {
    %c0_i32 = arith.constant 0 : i32
    %c0_i32_0 = arith.constant 0 : i32
    %c0_i32_1 = arith.constant 0 : i32
    return %arg0, %c0_i32, %c0_i32_0 : i32, i32, i32
  }
}

</mosaic_0001>

<llo_original>
// kernel: tpu_custom_call.1
$region0: #{tpu_custom_call.1}
  #allocation0 [shape = 'u32[]', space=smem, size = 0x4, offset = 0x4, fixed_abs, tag = 'smem constant byte address 0x4 - core index']
  #allocation1 [shape = 'u32[144,128]{1,0:T(1,128)}', space=vmem, size = 0x12000, scoped, tag = 'internal scratch']
  #allocation2 [shape = 'f32[1,1]{1,0:T(1,128)S(1)}', space=vmem, size = 0x200, scoped, tag = 'scoped memory for tpu_custom_call.1']
  %s0 = inlined_call_operand.vmem [shape: f32[8,32], index: 0, kind: input, shape index: {}]
  %s1 = inlined_call_operand.vmem [shape: bf16[64,32], index: 1, kind: input, shape index: {}]
  %s2 = inlined_call_operand.vmem [shape: f32[64,1], index: 2, kind: input, shape index: {}]
  %s3 = inlined_call_operand.vmem [shape: bf16[32,64], index: 3, kind: input, shape index: {}]
  %s4 = inlined_call_operand.vmem [shape: f32[32,1], index: 4, kind: input, shape index: {}]
  %s5 = inlined_call_operand.vmem [shape: f32[32,1], index: 5, kind: input, shape index: {}]
  %s6 = inlined_call_operand.<no memory space> [shape: f32[1,1], index: 6, kind: input, shape index: {}]
  %s7 = inlined_call_operand.hbm [shape: f32[1,1,8], index: 7, kind: output, shape index: {}]
  %s8 = sld [smem:[#allocation0]]
  $region38: #{tpu_custom_call.1} parent=0
    _
  %s10 = ssub.s32 1, %s8
  %s11 = scalar_select 0, %s10, %s8
  %v12 = vstv %s6
  %13 = vst [vmem:[#allocation2] sm:$0x1] %v12
  $region1: #{tpu_custom_call.1} parent=0
    #allocation3 [shape = 'u8[512]{0}', space=vmem, size = 0x400, scoped, tag = 'output window, operand 0, single buffered']
    #allocation4 [shape = 's32[1]{0}', space=sflag, size = 0x4, scoped, tag = 'scoped memory for tpu_custom_call.1']
    %14 = vsyncpa [#allocation4], 0
    // Predicated region
    $region2: #{tpu_custom_call.1} parent=1 // pred_check
      _
    $region3: #{tpu_custom_call.1} parent=1 // pred_check_branch
      %16 = sbr.rel (0) target = $region5
    $region4: #{tpu_custom_call.1} parent=1 // pred_region
      _
    $region5: #{tpu_custom_call.1} parent=1 // pred_fallthru
      _
    // Predicated region
    $region6: #{tpu_custom_call.1} parent=1 // pred_check
      _
    $region7: #{tpu_custom_call.1} parent=1 // pred_check_branch
      %18 = sbr.rel (0) target = $region9
    $region8: #{tpu_custom_call.1} parent=1 // pred_region
      _
    $region9: #{tpu_custom_call.1} parent=1 // pred_fallthru
      _
    // Predicated region
    $region10: #{tpu_custom_call.1} parent=1 // pred_check
      _
    $region11: #{tpu_custom_call.1} parent=1 // pred_check_branch
      %20 = sbr.rel (0) target = $region13
    $region12: #{tpu_custom_call.1} parent=1 // pred_region
      _
    $region13: #{tpu_custom_call.1} parent=1 // pred_fallthru
      _
    // Predicated region
    $region14: #{tpu_custom_call.1} parent=1 // pred_check
      _
    $region15: #{tpu_custom_call.1} parent=1 // pred_check_branch
      %22 = sbr.rel (0) target = $region17
    $region16: #{tpu_custom_call.1} parent=1 // pred_region
      _
    $region17: #{tpu_custom_call.1} parent=1 // pred_fallthru
      _
    // Predicated region
    $region18: #{tpu_custom_call.1} parent=1 // pred_check
      _
    $region19: #{tpu_custom_call.1} parent=1 // pred_check_branch
      %24 = sbr.rel (0) target = $region21
    $region20: #{tpu_custom_call.1} parent=1 // pred_region
      _
    $region21: #{tpu_custom_call.1} parent=1 // pred_fallthru
      _
    // Predicated region
    $region22: #{tpu_custom_call.1} parent=1 // pred_check
      _
    $region23: #{tpu_custom_call.1} parent=1 // pred_check_branch
      %26 = sbr.rel (0) target = $region25
    $region24: #{tpu_custom_call.1} parent=1 // pred_region
      _
    $region25: #{tpu_custom_call.1} parent=1 // pred_fallthru
      _
    // Predicated region
    $region26: #{tpu_custom_call.1} parent=1 // pred_check
      _
    $region27: #{tpu_custom_call.1} parent=1 // pred_check_branch
      %28 = sbr.rel (0) target = $region29
    $region28: #{tpu_custom_call.1} parent=1 // pred_region
      _
    $region29: #{tpu_custom_call.1} parent=1 // pred_fallthru
      _
    %v30 = vld [vmem:[%s0] sm:$0xff]
    %v31 = vpack.c.bf16 %v30, %v30
    %v32 = vld [vmem:[%s1] sm:$0xf]
    %v33 = vld [vmem:[%s1 + $0x4] sm:$0xf]
    %v34 = vld [vmem:[%s1 + $0x8] sm:$0xf]
    %v35 = vld [vmem:[%s1 + $0xc] sm:$0xf]
    %v36 = vld [vmem:[%s1 + $0x10] sm:$0xf]
    %v37 = vld [vmem:[%s1 + $0x14] sm:$0xf]
    %v38 = vld [vmem:[%s1 + $0x18] sm:$0xf]
    %v39 = vld [vmem:[%s1 + $0x1c] sm:$0xf]
    %v40 = vld [vmem:[%s2] sm:$0xff]
    %v41 = vld [vmem:[%s2 + $0x8] sm:$0xff]
    %v42 = vld [vmem:[%s2 + $0x10] sm:$0xff]
    %v43 = vld [vmem:[%s2 + $0x18] sm:$0xff]
    %v44 = vld [vmem:[%s2 + $0x20] sm:$0xff]
    %v45 = vld [vmem:[%s2 + $0x28] sm:$0xff]
    %v46 = vld [vmem:[%s2 + $0x30] sm:$0xff]
    %v47 = vld [vmem:[%s2 + $0x38] sm:$0xff]
    %49 = vset.pattern.permute.xlu0 0
    %50 = vperm.xlu0 %49, %v40
    %v51 = vpop.permute.xlu0 %50
    %54 = vset.pattern.permute.xlu0 0
    %55 = vperm.xlu0 %54, %v41
    %v56 = vpop.permute.xlu0 %55
    %59 = vset.pattern.permute.xlu0 0
    %60 = vperm.xlu0 %59, %v42
    %v61 = vpop.permute.xlu0 %60
    %64 = vset.pattern.permute.xlu0 0
    %65 = vperm.xlu0 %64, %v43
    %v66 = vpop.permute.xlu0 %65
    %69 = vset.pattern.permute.xlu0 0
    %70 = vperm.xlu0 %69, %v44
    %v71 = vpop.permute.xlu0 %70
    %74 = vset.pattern.permute.xlu0 0
    %75 = vperm.xlu0 %74, %v45
    %v76 = vpop.permute.xlu0 %75
    %79 = vset.pattern.permute.xlu0 0
    %80 = vperm.xlu0 %79, %v46
    %v81 = vpop.permute.xlu0 %80
    %84 = vset.pattern.permute.xlu0 0
    %85 = vperm.xlu0 %84, %v47
    %v86 = vpop.permute.xlu0 %85
    %v96 = vunpack.c.l.b16 %v32
    %v97 = vunpack.c.l.b16 %v33
    %v98 = vunpack.c.l.b16 %v34
    %v99 = vunpack.c.l.b16 %v35
    %v100 = vunpack.c.l.b16 %v36
    %v101 = vunpack.c.l.b16 %v37
    %v102 = vunpack.c.l.b16 %v38
    %v103 = vunpack.c.l.b16 %v39
    %v104 = vpack.c.b16 %v97, %v96
    %v105 = vpack.c.b16 %v99, %v98
    %v106 = vpack.c.b16 %v101, %v100
    %v107 = vpack.c.b16 %v103, %v102
    %vm108 = vcmask 261120
    %v110 = vsel %vm108, %v104, 0
    %v113 = vsel %vm108, %v105, 0
    %v116 = vsel %vm108, %v106, 0
    %v119 = vsel %vm108, %v107, 0
    %v122 = vsel %vm108, %v31, 0
    %124 = vmatprep.subr.bf16.mxu0 0
    %125 = vmatpush1.bf16.xpose.msra.mxu0 %v122
    %126 = vmatprep.subr.bf16.mxu0 0
    %127 = vmatpush1.bf16.xpose.msra.mxu0 0
    %128 = vmatprep.subr.bf16.mxu0 0
    %129 = vmatpush1.bf16.xpose.msra.mxu0 0
    %130 = vmatprep.subr.bf16.mxu0 0
    %131 = vmatpush1.bf16.xpose.msra.mxu0 0
    %132 = vmatprep.subr.bf16.mxu0 0
    %133 = vmatpush1.bf16.xpose.msra.mxu0 0
    %134 = vmatprep.subr.bf16.mxu0 0
    %135 = vmatpush1.bf16.xpose.msra.mxu0 0
    %136 = vmatprep.subr.bf16.mxu0 0
    %137 = vmatpush1.bf16.xpose.msra.mxu0 0
    %138 = vmatprep.subr.bf16.mxu0 0
    %139 = vmatpush1.bf16.xpose.msra.mxu0 0
    %140 = vmatprep.subr.bf16.mxu0 0
    %141 = vmatpush1.bf16.xpose.msra.mxu0 0
    %142 = vmatprep.subr.bf16.mxu0 0
    %143 = vmatpush1.bf16.xpose.msra.mxu0 0
    %144 = vmatprep.subr.bf16.mxu0 0
    %145 = vmatpush1.bf16.xpose.msra.mxu0 0
    %146 = vmatprep.subr.bf16.mxu0 0
    %147 = vmatpush1.bf16.xpose.msra.mxu0 0
    %148 = vmatprep.subr.bf16.mxu0 0
    %149 = vmatpush1.bf16.xpose.msra.mxu0 0
    %150 = vmatprep.subr.bf16.mxu0 0
    %151 = vmatpush1.bf16.xpose.msra.mxu0 0
    %152 = vmatprep.subr.bf16.mxu0 0
    %153 = vmatpush1.bf16.xpose.msra.mxu0 0
    %154 = vmatprep.subr.bf16.mxu0 0
    %155 = vmatpush1.bf16.xpose.msra.mxu0 0
    %156 = vmatprep.mubr.bf16.mxu0 0
    %157 = vmatmul.mubr.bf16.gmra.mrb[0].mxu0 %v110
    %v158 = vpop.f32.mrb[0].mxu0
    %v159 = vadd.f32 %v51, %v158
    %v160 = vpop.f32.mrb[0].mxu0
    %v161 = vpop.f32.mrb[0].mxu0
    %v162 = vadd.f32 %v56, %v161
    %v163 = vpop.f32.mrb[0].mxu0
    %164 = vmatprep.mubr.bf16.mxu0 0
    %165 = vmatmul.mubr.bf16.gmra.mrb[0].mxu0 %v113
    %v166 = vpop.f32.mrb[0].mxu0
    %v167 = vadd.f32 %v61, %v166
    %v168 = vpop.f32.mrb[0].mxu0
    %v169 = vpop.f32.mrb[0].mxu0
    %v170 = vadd.f32 %v66, %v169
    %v171 = vpop.f32.mrb[0].mxu0
    %172 = vmatprep.mubr.bf16.mxu0 0
    %173 = vmatmul.mubr.bf16.gmra.mrb[0].mxu0 %v116
    %v174 = vpop.f32.mrb[0].mxu0
    %v175 = vadd.f32 %v71, %v174
    %v176 = vpop.f32.mrb[0].mxu0
    %v177 = vpop.f32.mrb[0].mxu0
    %v178 = vadd.f32 %v76, %v177
    %v179 = vpop.f32.mrb[0].mxu0
    %180 = vmatprep.mubr.bf16.mxu0 0
    %181 = vmatmul.mubr.bf16.gmra.mrb[0].mxu0 %v119
    %v182 = vpop.f32.mrb[0].mxu0
    %v183 = vadd.f32 %v81, %v182
    %v184 = vpop.f32.mrb[0].mxu0
    %v185 = vpop.f32.mrb[0].mxu0
    %v186 = vadd.f32 %v86, %v185
    %v187 = vpop.f32.mrb[0].mxu0
    %188 = vdwg.mxu0
    %v189 = vmax.f32 %v159, 0.0
    %v190 = vmax.f32 %v162, 0.0
    %v191 = vmax.f32 %v167, 0.0
    %v192 = vmax.f32 %v170, 0.0
    %v193 = vmax.f32 %v175, 0.0
    %v194 = vmax.f32 %v178, 0.0
    %v195 = vmax.f32 %v183, 0.0
    %v196 = vmax.f32 %v186, 0.0
    %v197 = vld [vmem:[%s3] sm:$0xf]
    %v198 = vld [vmem:[%s3 + $0x4] sm:$0xf]
    %v199 = vld [vmem:[%s3 + $0x8] sm:$0xf]
    %v200 = vld [vmem:[%s3 + $0xc] sm:$0xf]
    %v201 = vld [vmem:[%s4] sm:$0xff]
    %v202 = vld [vmem:[%s4 + $0x8] sm:$0xff]
    %v203 = vld [vmem:[%s4 + $0x10] sm:$0xff]
    %v204 = vld [vmem:[%s4 + $0x18] sm:$0xff]
    %v205 = vpack.c.bf16 %v190, %v189
    %v206 = vpack.c.bf16 %v192, %v191
    %v207 = vpack.c.bf16 %v194, %v193
    %v208 = vpack.c.bf16 %v196, %v195
    %210 = vset.pattern.permute.xlu0 0
    %211 = vperm.xlu0 %210, %v201
    %v212 = vpop.permute.xlu0 %211
    %215 = vset.pattern.permute.xlu0 0
    %216 = vperm.xlu0 %215, %v202
    %v217 = vpop.permute.xlu0 %216
    %220 = vset.pattern.permute.xlu0 0
    %221 = vperm.xlu0 %220, %v203
    %v222 = vpop.permute.xlu0 %221
    %225 = vset.pattern.permute.xlu0 0
    %226 = vperm.xlu0 %225, %v204
    %v227 = vpop.permute.xlu0 %226
    %v233 = vunpack.c.l.b16 %v197
    %v234 = vunpack.c.l.b16 %v198
    %v235 = vunpack.c.l.b16 %v199
    %v236 = vunpack.c.l.b16 %v200
    %v237 = vpack.c.b16 %v234, %v233
    %v238 = vpack.c.b16 %v236, %v235
    %vm239 = vcmask 523264
    %v241 = vsel %vm239, %v237, 0
    %v244 = vsel %vm239, %v238, 0
    %246 = vmatprep.subr.bf16.mxu0 0
    %247 = vmatpush1.bf16.msra.mxu0 %v205
    %248 = vmatprep.subr.bf16.mxu0 0
    %249 = vmatpush1.bf16.msra.mxu0 %v206
    %250 = vmatprep.subr.bf16.mxu0 0
    %251 = vmatpush1.bf16.msra.mxu0 %v207
    %252 = vmatprep.subr.bf16.mxu0 0
    %253 = vmatpush1.bf16.msra.mxu0 %v208
    %254 = vmatprep.subr.bf16.mxu0 0
    %255 = vmatpush1.bf16.msra.mxu0 0
    %256 = vmatprep.subr.bf16.mxu0 0
    %257 = vmatpush1.bf16.msra.mxu0 0
    %258 = vmatprep.subr.bf16.mxu0 0
    %259 = vmatpush1.bf16.msra.mxu0 0
    %260 = vmatprep.subr.bf16.mxu0 0
    %261 = vmatpush1.bf16.msra.mxu0 0
    %262 = vmatprep.subr.bf16.mxu0 0
    %263 = vmatpush1.bf16.msra.mxu0 0
    %264 = vmatprep.subr.bf16.mxu0 0
    %265 = vmatpush1.bf16.msra.mxu0 0
    %266 = vmatprep.subr.bf16.mxu0 0
    %267 = vmatpush1.bf16.msra.mxu0 0
    %268 = vmatprep.subr.bf16.mxu0 0
    %269 = vmatpush1.bf16.msra.mxu0 0
    %270 = vmatprep.subr.bf16.mxu0 0
    %271 = vmatpush1.bf16.msra.mxu0 0
    %272 = vmatprep.subr.bf16.mxu0 0
    %273 = vmatpush1.bf16.msra.mxu0 0
    %274 = vmatprep.subr.bf16.mxu0 0
    %275 = vmatpush1.bf16.msra.mxu0 0
    %276 = vmatprep.subr.bf16.mxu0 0
    %277 = vmatpush1.bf16.msra.mxu0 0
    %278 = vmatprep.mubr.bf16.mxu0 0
    %279 = vmatmul.mubr.bf16.gmra.mrb[0].mxu0 %v241
    %v280 = vpop.f32.mrb[0].mxu0
    %v281 = vadd.f32 %v212, %v280
    %v282 = vpop.f32.mrb[0].mxu0
    %v283 = vpop.f32.mrb[0].mxu0
    %v284 = vadd.f32 %v217, %v283
    %v285 = vpop.f32.mrb[0].mxu0
    %286 = vmatprep.mubr.bf16.mxu0 0
    %287 = vmatmul.mubr.bf16.gmra.mrb[0].mxu0 %v244
    %v288 = vpop.f32.mrb[0].mxu0
    %v289 = vadd.f32 %v222, %v288
    %v290 = vpop.f32.mrb[0].mxu0
    %v291 = vpop.f32.mrb[0].mxu0
    %v292 = vadd.f32 %v227, %v291
    %v293 = vpop.f32.mrb[0].mxu0
    %294 = vdwg.mxu0
    %v295 = vmax.f32 %v281, 0.0
    %v296 = vmax.f32 %v284, 0.0
    %v297 = vmax.f32 %v289, 0.0
    %v298 = vmax.f32 %v292, 0.0
    %v299 = vld [vmem:[%s5] sm:$0xff]
    %v300 = vld [vmem:[%s5 + $0x8] sm:$0xff]
    %v301 = vld [vmem:[%s5 + $0x10] sm:$0xff]
    %v302 = vld [vmem:[%s5 + $0x18] sm:$0xff]
    %v303 = vld [vmem:[#allocation2] sm:$0x1]
    %305 = vset.pattern.permute.xlu0 0
    %306 = vperm.xlu0 %305, %v299
    %v307 = vpop.permute.xlu0 %306
    %310 = vset.pattern.permute.xlu0 0
    %311 = vperm.xlu0 %310, %v300
    %v312 = vpop.permute.xlu0 %311
    %315 = vset.pattern.permute.xlu0 0
    %316 = vperm.xlu0 %315, %v301
    %v317 = vpop.permute.xlu0 %316
    %320 = vset.pattern.permute.xlu0 0
    %321 = vperm.xlu0 %320, %v302
    %v322 = vpop.permute.xlu0 %321
    %v324 = vmul.f32 %v295, %v307
    %v325 = vmul.f32 %v296, %v312
    %v326 = vmul.f32 %v297, %v317
    %v327 = vmul.f32 %v298, %v322
    %vm328 = vcmask 64512
    %v329 = vsel %vm328, %v324, 0.0
    %v330 = vsel %vm328, %v325, 0.0
    %v331 = vadd.f32 %v329, %v330
    %v332 = vsel %vm328, %v326, 0.0
    %v333 = vadd.f32 %v331, %v332
    %v334 = vsel %vm328, %v327, 0.0
    %v335 = vadd.f32 %v333, %v334
    %v336 = vrot.slane %v335, 4
    %v337 = vadd.f32 %v335, %v336
    %v338 = vrot.slane %v337, 2
    %v339 = vadd.f32 %v337, %v338
    %v340 = vrot.slane %v339, 1
    %v341 = vadd.f32 %v339, %v340
    %343 = vset.pattern.permute.xlu0 0
    %344 = vperm.xlu0 %343, %v303
    %v345 = vpop.permute.xlu0 %344
    %v347 = vlaneseq
    %v348 = vshrl.u32 %v347, 7
    %v349 = vsub.s32 0, %v348
    %v350 = vrot.slane %v345, %v349
    %v351 = vadd.f32 %v341, %v350
    %v352 = vxor.u32 %v351, 2147483648
    %v353 = vmul.f32 %v352, 1.442695
    %v354 = vpow.pop %v353
    %v355 = vadd.f32 %v354, 1.0
    %v356 = vrcp.pop %v355
    %v357 = vmul.f32 1.0, %v356
    %vm358 = vcmask 57344
    %359 = vst.msk [vmem:[#allocation3] sm:$0x1] %vm358, %v357
    // Predicated region
    $region30: #{tpu_custom_call.1} parent=1 // pred_check
      _
    $region31: #{tpu_custom_call.1} parent=1 // pred_check_branch
      %361 = sbr.rel (0) target = $region33
    $region32: #{tpu_custom_call.1} parent=1 // pred_region
      %s363 = ssub.s32 16, 16
      %364 = vsyncadd [#allocation4], %s363
      %s366 = sshll.u32 [#allocation3], 4
      %s367 = int_to_ptr.vmem [resolvable:$true] %s366
      %369 = dma.vmem_to_hbm [thread:$0]  %s367, 16, %s7, [#allocation4]
    $region33: #{tpu_custom_call.1} parent=1 // pred_fallthru
      _
    // Predicated region
    $region34: #{tpu_custom_call.1} parent=1 // pred_check
      _
    $region35: #{tpu_custom_call.1} parent=1 // pred_check_branch
      %371 = sbr.rel (0) target = $region37
    $region36: #{tpu_custom_call.1} parent=1 // pred_region
      %372 = dma.done [#allocation4], 16
    $region37: #{tpu_custom_call.1} parent=1 // pred_fallthru
      _
    %373 = vsyncpa [#allocation4], 1

</llo_original>
